<compile_context>
chip_gen: v7x
topology: tpu7x:2x2x1
jax: 0.10.0
libtpu: 0.0.40
codegen_flags: <defaults>
</compile_context>

<pallas_src>
import functools

import jax
import jax.numpy as jnp
from jax.experimental import pallas as pl
from jax.experimental.pallas import tpu as pltpu


def _round_up(n, m):
    return ((n + m - 1) // m) * m


def _center_loss_kernel(x_ref, labels_ref, c_ref, out_ref, *,
                        batch, num_classes, tile_b):
    """One batch tile of CenterLoss.

    x_ref:      (tile_b, D) feature tile (VMEM).
    labels_ref: (tile_b, 1) int32 label tile (VMEM).
    c_ref:      (C, D) full centers table (VMEM resident, single-buffered).
    out_ref:    (8, 128) f32; tile partial sum at [0, 0], zeros elsewhere.
    """
    pid = pl.program_id(0)
    base = pid * tile_b

    x = x_ref[...].astype(jnp.float32)                         # (tile_b, D)
    labels = labels_ref[...]                                    # (tile_b, 1)

    # One-hot gather of c_{y_b} on the MXU: (tile_b, C) @ (C, D) -> (tile_b, D).
    # The one-hot is exact in any dtype, so the gathered rows are exact.
    class_ids = jax.lax.broadcasted_iota(jnp.int32, (tile_b, num_classes), 1)
    onehot = (labels == class_ids).astype(c_ref.dtype)
    g = jnp.dot(onehot, c_ref[...], preferred_element_type=jnp.float32)

    # Per-sample squared distance on the VPU, accumulated in f32.
    diff = x - g
    d = jnp.sum(diff * diff, axis=1, keepdims=True)             # (tile_b, 1)
    d = jnp.clip(d, 1e-12, 1e12)                                # labeled entries only

    # Mask padded rows (their labels are 0 and x rows are 0, so d is finite;
    # they simply must not contribute).
    rows = jax.lax.broadcasted_iota(jnp.int32, (tile_b, 1), 0) + base
    d = jnp.where(rows < batch, d, 0.0)
    tile_sum = jnp.sum(d)                                       # scalar

    # Lane/sublane-aligned output block: partial sum at [0, 0], zeros elsewhere.
    r = jax.lax.broadcasted_iota(jnp.int32, (8, 128), 0)
    c = jax.lax.broadcasted_iota(jnp.int32, (8, 128), 1)
    out_ref[...] = jnp.where((r == 0) & (c == 0), tile_sum, 0.0)


def _vmem_limit_bytes(tile_b, D, C, x_itemsize, c_itemsize):
    """Size the scoped VMEM limit to the actual (lane-padded) footprint."""
    lane, sub = 128, 8
    dp = _round_up(max(D, 1), lane)
    cp = _round_up(max(C, 1), sub)
    x_b = 2 * tile_b * dp * x_itemsize          # double-buffered feature tile
    lab_b = 2 * tile_b * lane * 4               # double-buffered label tile (lane-padded)
    cent_b = 1 * cp * dp * c_itemsize           # single-buffered centers table
    out_b = 2 * sub * lane * 4                  # double-buffered output block
    est = x_b + lab_b + cent_b + out_b
    return int(min(128 << 20, max(16 << 20, 2 * est)))  # 2x headroom for internal scratch


def center_loss(x, centers, labels, *, tile_b=512):
    """Pallas CenterLoss forward.

    Args:
      x:       (batch, feat_dim) features.
      centers: (num_classes, feat_dim) class centers.
      labels:  (batch,) integer class labels.
    Returns:
      scalar float32 loss (identical semantics to the PyTorch reference).
    """
    B, D = x.shape
    C = centers.shape[0]

    # Clamp the batch tile: don't over-pad tiny batches, keep it a multiple of 8,
    # and keep the double-buffered x tile under ~8 MiB of VMEM.
    dp = _round_up(max(D, 1), 128)
    max_tile = max(8, ((8 << 20) // (2 * dp * x.dtype.itemsize)) // 8 * 8)
    tile_b = min(tile_b, max_tile, _round_up(B, 8))

    nb = pl.cdiv(B, tile_b)
    Bp = nb * tile_b

    if Bp != B:
        x = jnp.pad(x, ((0, Bp - B), (0, 0)))
        labels = jnp.pad(labels, (0, Bp - B))
    labels2d = labels.astype(jnp.int32).reshape(Bp, 1)

    kernel = functools.partial(
        _center_loss_kernel, batch=B, num_classes=C, tile_b=tile_b)

    per_tile = pl.pallas_call(
        kernel,
        out_shape=jax.ShapeDtypeStruct((nb * 8, 128), jnp.float32),
        grid=(nb,),
        in_specs=[
            # features: one batch tile per grid step
            pl.BlockSpec((tile_b, D), lambda i: (i, 0)),
            # labels: matching batch tile
            pl.BlockSpec((tile_b, 1), lambda i: (i, 0)),
            # centers: whole table, constant block index -> single-buffer it
            pl.BlockSpec((C, D), lambda i: (0, 0),
                         pipeline_mode=pl.Buffered(buffer_count=1)),
        ],
        out_specs=pl.BlockSpec((8, 128), lambda i: (i, 0)),
        compiler_params=pltpu.CompilerParams(
            dimension_semantics=("parallel",),
            vmem_limit_bytes=_vmem_limit_bytes(
                tile_b, D, C, x.dtype.itemsize, centers.dtype.itemsize),
        ),
    )(x, labels2d, centers)

    # Tiny epilogue: sum of nb partial sums (zeros elsewhere contribute nothing),
    # plus the clamp floor from the B*(C-1) masked-off zero entries.
    loss = per_tile.sum() / B + (C - 1) * 1e-12
    return loss


def center_loss_ref(x, centers, labels):
    """Pure-JAX reference mirroring the PyTorch forward."""
    B = x.shape[0]
    C = centers.shape[0]
    distmat = (
        jnp.sum(x**2, axis=1, keepdims=True)
        + jnp.sum(centers**2, axis=1)[None, :]
        - 2.0 * x @ centers.T
    )
    mask = (labels[:, None] == jnp.arange(C)[None, :]).astype(jnp.float32)
    dist = jnp.clip(distmat * mask, 1e-12, 1e12)
    return jnp.sum(dist) / B


if __name__ == "__main__":
    # Module defaults: num_classes=10, feat_dim=2.
    num_classes = 10
    feat_dim = 2
    batch = 4

    key = jax.random.PRNGKey(0)
    k_x, k_c, k_l = jax.random.split(key, 3)

    # Deterministic parameter init (stands in for torch.randn centers).
    centers = jax.random.normal(k_c, (num_classes, feat_dim), dtype=jnp.float32)
    x = jax.random.normal(k_x, (batch, feat_dim), dtype=jnp.float32)
    labels = jax.random.randint(k_l, (batch,), 0, num_classes, dtype=jnp.int32)

    loss = jax.block_until_ready(jax.jit(center_loss)(x, centers, labels))
    loss_ref = jax.block_until_ready(center_loss_ref(x, centers, labels))

    assert jnp.allclose(loss, loss_ref, rtol=1e-5, atol=1e-5), (loss, loss_ref)
    print("KERNEL_OK")
</pallas_src>

<mosaic_0001>
module attributes {stable_mosaic.version = 11 : i64} {
  func.func @_center_loss_kernel(%arg0: i32, %arg1: memref<8x2xf32, #tpu.memory_space<vmem>>, %arg2: memref<8x1xi32, #tpu.memory_space<vmem>>, %arg3: memref<10x2xf32, #tpu.memory_space<vmem>>, %arg4: memref<8x128xf32, #tpu.memory_space<vmem>>) attributes {dimension_semantics = [#tpu.dimension_semantics<parallel>], iteration_bounds = array<i64: 1>, scalar_prefetch = 0 : i64, scratch_operands = 0 : i64, tpu.core_type = #tpu.core_type<tc>, window_params = [{transform_indices = @transform_0, window_bounds = array<i64: 8, 2>}, {transform_indices = @transform_1, window_bounds = array<i64: 8, 1>}, {pipeline_mode = #tpu.pipeline_mode<synchronous>, transform_indices = @transform_2, window_bounds = array<i64: 10, 2>}, {transform_indices = @transform_3, window_bounds = array<i64: 8, 128>}]} {
    %c8_i32 = arith.constant 8 : i32
    %0 = arith.muli %arg0, %c8_i32 : i32
    %c0 = arith.constant 0 : index
    %c0_0 = arith.constant 0 : index
    %1 = vector.load %arg1[%c0, %c0_0] : memref<8x2xf32, #tpu.memory_space<vmem>>, vector<8x2xf32>
    %c0_1 = arith.constant 0 : index
    %c0_2 = arith.constant 0 : index
    %2 = vector.load %arg2[%c0_1, %c0_2] : memref<8x1xi32, #tpu.memory_space<vmem>>, vector<8x1xi32>
    %3 = tpu.iota {dimensions = array<i32: 1>} : vector<8x10xi32>
    %4 = vector.broadcast %2 : vector<8x1xi32> to vector<8x10xi32>
    %5 = arith.cmpi eq, %4, %3 : vector<8x10xi32>
    %6 = arith.extui %5 : vector<8x10xi1> to vector<8x10xi32>
    %7 = arith.sitofp %6 : vector<8x10xi32> to vector<8x10xf32>
    %c0_3 = arith.constant 0 : index
    %c0_4 = arith.constant 0 : index
    %8 = vector.load %arg3[%c0_3, %c0_4] : memref<10x2xf32, #tpu.memory_space<vmem>>, vector<10x2xf32>
    %cst = arith.constant dense<0.000000e+00> : vector<8x2xf32>
    %9 = tpu.matmul %7, %8, %cst {dimension_numbers = #tpu.dot_dimension_numbers<[1], [0], [0], [1], [0, 0, 1, 1], [], []>} : vector<8x10xf32>, vector<10x2xf32>, vector<8x2xf32> -> vector<8x2xf32>
    %10 = arith.subf %1, %9 : vector<8x2xf32>
    %11 = arith.mulf %10, %10 : vector<8x2xf32>
    %cst_5 = arith.constant dense<0.000000e+00> : vector<8xf32>
    %12 = vector.multi_reduction <add>, %11, %cst_5 [1] : vector<8x2xf32> to vector<8xf32>
    %13 = vector.shape_cast %12 : vector<8xf32> to vector<8x1xf32>
    %cst_6 = arith.constant 9.99999996E-13 : f32
    %cst_7 = arith.constant 9.99999995E+11 : f32
    %14 = vector.broadcast %cst_6 : f32 to vector<8x1xf32>
    %15 = arith.maximumf %14, %13 : vector<8x1xf32>
    %16 = vector.broadcast %cst_7 : f32 to vector<8x1xf32>
    %17 = arith.minimumf %16, %15 : vector<8x1xf32>
    %18 = tpu.iota {dimensions = array<i32: 0>} : vector<8x1xi32>
    %19 = vector.broadcast %0 : i32 to vector<8x1xi32>
    %20 = arith.addi %18, %19 : vector<8x1xi32>
    %c4_i32 = arith.constant 4 : i32
    %21 = vector.broadcast %c4_i32 : i32 to vector<8x1xi32>
    %22 = arith.cmpi slt, %20, %21 : vector<8x1xi32>
    %cst_8 = arith.constant 0.000000e+00 : f32
    %23 = vector.broadcast %cst_8 : f32 to vector<8x1xf32>
    %24 = arith.select %22, %17, %23 : vector<8x1xi1>, vector<8x1xf32>
    %25 = vector.shape_cast %24 : vector<8x1xf32> to vector<1x8x1xf32>
    %cst_9 = arith.constant dense<0.000000e+00> : vector<1xf32>
    %26 = vector.multi_reduction <add>, %25, %cst_9 [1, 2] : vector<1x8x1xf32> to vector<1xf32>
    %27 = vector.shape_cast %26 : vector<1xf32> to vector<1x1x1xf32>
    %28 = vector.extract %27[0, 0, 0] : f32 from vector<1x1x1xf32>
    %29 = tpu.iota {dimensions = array<i32: 0>} : vector<8x128xi32>
    %30 = tpu.iota {dimensions = array<i32: 1>} : vector<8x128xi32>
    %c0_i32 = arith.constant 0 : i32
    %31 = vector.broadcast %c0_i32 : i32 to vector<8x128xi32>
    %32 = arith.cmpi eq, %29, %31 : vector<8x128xi32>
    %c0_i32_10 = arith.constant 0 : i32
    %33 = vector.broadcast %c0_i32_10 : i32 to vector<8x128xi32>
    %34 = arith.cmpi eq, %30, %33 : vector<8x128xi32>
    %35 = arith.andi %32, %34 : vector<8x128xi1>
    %cst_11 = arith.constant 0.000000e+00 : f32
    %36 = vector.broadcast %28 : f32 to vector<8x128xf32>
    %37 = vector.broadcast %cst_11 : f32 to vector<8x128xf32>
    %38 = arith.select %35, %36, %37 : vector<8x128xi1>, vector<8x128xf32>
    %c0_12 = arith.constant 0 : index
    %c0_13 = arith.constant 0 : index
    %39 = vector.load %arg4[%c0_12, %c0_13] : memref<8x128xf32, #tpu.memory_space<vmem>>, vector<8x128xf32>
    tpu.vector_store %arg4[%c0_12, %c0_13], %38 {strides = array<i32>} : memref<8x128xf32, #tpu.memory_space<vmem>>, vector<8x128xf32>,
    return
  }
  func.func @transform_0(%arg0: i32) -> (i32, i32) {
    %c0_i32 = arith.constant 0 : i32
    %c0_i32_0 = arith.constant 0 : i32
    return %arg0, %c0_i32 : i32, i32
  }
  func.func @transform_1(%arg0: i32) -> (i32, i32) {
    %c0_i32 = arith.constant 0 : i32
    %c0_i32_0 = arith.constant 0 : i32
    return %arg0, %c0_i32 : i32, i32
  }
  func.func @transform_2(%arg0: i32) -> (i32, i32) {
    %c0_i32 = arith.constant 0 : i32
    %c0_i32_0 = arith.constant 0 : i32
    %c0_i32_1 = arith.constant 0 : i32
    return %c0_i32, %c0_i32_0 : i32, i32
  }
  func.func @transform_3(%arg0: i32) -> (i32, i32) {
    %c0_i32 = arith.constant 0 : i32
    %c0_i32_0 = arith.constant 0 : i32
    return %arg0, %c0_i32 : i32, i32
  }
}

</mosaic_0001>

<llo_original>
// kernel: center_loss.1
$region0: #{center_loss.1}
  #allocation0 [shape = 'u32[]', space=smem, size = 0x4, offset = 0x4, fixed_abs, tag = 'smem constant byte address 0x4 - core index']
  #allocation1 [shape = 'u32[144,128]{1,0:T(1,128)}', space=vmem, size = 0x12000, scoped, tag = 'internal scratch']
  %s0 = inlined_call_operand.vmem [shape: f32[8,2], index: 0, kind: input, shape index: {}]
  %s1 = inlined_call_operand.vmem [shape: s32[8,1], index: 1, kind: input, shape index: {}]
  %s2 = inlined_call_operand.vmem [shape: f32[10,2], index: 2, kind: input, shape index: {}]
  %s3 = inlined_call_operand.vmem [shape: f32[8,128], index: 3, kind: output, shape index: {}]
  %s4 = sld [smem:[#allocation0]]
  $region22: #{center_loss.1} parent=0
    _
  %s6 = ssub.s32 1, %s4
  %s7 = scalar_select 0, %s6, %s4
  // Predicated region
  $region2: #{center_loss.1} parent=0 // pred_check
    _
  $region3: #{center_loss.1} parent=0 // pred_check_branch
    %9 = sbr.rel (0) target = $region5
  $region4: #{center_loss.1} parent=0 // pred_region
    _
  $region5: #{center_loss.1} parent=0 // pred_fallthru
    _
  // Predicated region
  $region6: #{center_loss.1} parent=0 // pred_check
    _
  $region7: #{center_loss.1} parent=0 // pred_check_branch
    %11 = sbr.rel (0) target = $region9
  $region8: #{center_loss.1} parent=0 // pred_region
    _
  $region9: #{center_loss.1} parent=0 // pred_fallthru
    _
  // Predicated region
  $region10: #{center_loss.1} parent=0 // pred_check
    _
  $region11: #{center_loss.1} parent=0 // pred_check_branch
    %13 = sbr.rel (0) target = $region13
  $region12: #{center_loss.1} parent=0 // pred_region
    _
  $region13: #{center_loss.1} parent=0 // pred_fallthru
    _
  %s14 = smul.u32 0, 8
  %v15 = vld [vmem:[%s0] sm:$0xff]
  %v16 = vld [vmem:[%s1] sm:$0xff]
  %v17 = vlaneseq
  %v18 = vand.u32 %v17, 127
  %19 = vset.pattern.permute.xlu0 0
  %20 = vperm.xlu0 %19, %v16
  %v21 = vpop.permute.xlu0 %20
  %vm22 = vcmp.eq.s32.totalorder %v21, %v18
  %v23 = vsel %vm22, 1, 0
  %v24 = vcvt.s32.f32 %v23
  %v25 = vld [vmem:[%s2] sm:$0xff]
  %v26 = vld [vmem:[%s2 + $0x8] sm:$0x3]
  %vm27 = vcmask 80896
  %v29 = vsel %vm27, %v24, 0
  %vm31 = vcmask 1041408
  %v33 = vsel %vm31, %v26, 0
  %35 = vmatprep.subr.mxu0 0.0
  %36 = vmatpush1.msra.mxu0 %v25
  %37 = vmatprep.subr.mxu0 0.0
  %38 = vmatpush1.msra.mxu0 %v33
  %39 = vmatprep.subr.mxu0 0.0
  %40 = vmatpush1.msra.mxu0 0.0
  %41 = vmatprep.subr.mxu0 0.0
  %42 = vmatpush1.msra.mxu0 0.0
  %43 = vmatprep.subr.mxu0 0.0
  %44 = vmatpush1.msra.mxu0 0.0
  %45 = vmatprep.subr.mxu0 0.0
  %46 = vmatpush1.msra.mxu0 0.0
  %47 = vmatprep.subr.mxu0 0.0
  %48 = vmatpush1.msra.mxu0 0.0
  %49 = vmatprep.subr.mxu0 0.0
  %50 = vmatpush1.msra.mxu0 0.0
  %51 = vmatprep.subr.mxu0 0.0
  %52 = vmatpush1.msra.mxu0 0.0
  %53 = vmatprep.subr.mxu0 0.0
  %54 = vmatpush1.msra.mxu0 0.0
  %55 = vmatprep.subr.mxu0 0.0
  %56 = vmatpush1.msra.mxu0 0.0
  %57 = vmatprep.subr.mxu0 0.0
  %58 = vmatpush1.msra.mxu0 0.0
  %59 = vmatprep.subr.mxu0 0.0
  %60 = vmatpush1.msra.mxu0 0.0
  %61 = vmatprep.subr.mxu0 0.0
  %62 = vmatpush1.msra.mxu0 0.0
  %63 = vmatprep.subr.mxu0 0.0
  %64 = vmatpush1.msra.mxu0 0.0
  %65 = vmatprep.subr.mxu0 0.0
  %66 = vmatpush1.msra.mxu0 0.0
  %67 = vmatprep.subr.mxu0 0.0
  %68 = vmatpush1.msra.mxu0 0.0
  %69 = vmatprep.subr.mxu0 0.0
  %70 = vmatpush1.msra.mxu0 0.0
  %71 = vmatprep.subr.mxu0 0.0
  %72 = vmatpush1.msra.mxu0 0.0
  %73 = vmatprep.subr.mxu0 0.0
  %74 = vmatpush1.msra.mxu0 0.0
  %75 = vmatprep.subr.mxu0 0.0
  %76 = vmatpush1.msra.mxu0 0.0
  %77 = vmatprep.subr.mxu0 0.0
  %78 = vmatpush1.msra.mxu0 0.0
  %79 = vmatprep.subr.mxu0 0.0
  %80 = vmatpush1.msra.mxu0 0.0
  %81 = vmatprep.subr.mxu0 0.0
  %82 = vmatpush1.msra.mxu0 0.0
  %83 = vmatprep.subr.mxu0 0.0
  %84 = vmatpush1.msra.mxu0 0.0
  %85 = vmatprep.subr.mxu0 0.0
  %86 = vmatpush1.msra.mxu0 0.0
  %87 = vmatprep.subr.mxu0 0.0
  %88 = vmatpush1.msra.mxu0 0.0
  %89 = vmatprep.subr.mxu0 0.0
  %90 = vmatpush1.msra.mxu0 0.0
  %91 = vmatprep.subr.mxu0 0.0
  %92 = vmatpush1.msra.mxu0 0.0
  %93 = vmatprep.subr.mxu0 0.0
  %94 = vmatpush1.msra.mxu0 0.0
  %95 = vmatprep.subr.mxu0 0.0
  %96 = vmatpush1.msra.mxu0 0.0
  %97 = vmatprep.subr.mxu0 0.0
  %98 = vmatpush1.msra.mxu0 0.0
  %99 = vmatprep.mubr.f32.mxu0 0.0
  %100 = vmatmul.mubr.f32.gmra.mrb[0].mxu0 %v29
  %v101 = vpop.f32.mrb[0].mxu0
  %v102 = vadd.f32 0.0, %v101
  %v103 = vpop.f32.mrb[0].mxu0
  %104 = vdwg.mxu0
  %v105 = vsub.f32 %v15, %v102
  %v106 = vmul.f32 %v105, %v105
  %vm107 = vcmask 15360
  %v108 = vsel %vm107, %v106, 0.0
  %109 = vadd.xlane.f32.xlu0 %v108
  %v110 = vpop.xlane.xlu0 %109
  %v111 = vmax.f32 %v110, 1e-12
  %v112 = vmin.f32 %v111, 1e+12
  %v113 = vlaneseq
  %v114 = vshrl.u32 %v113, 7
  %v115 = vstv %s14
  %v116 = vadd.s32 %v114, %v115
  %vm117 = vcmp.lt.s32.totalorder %v116, 4
  %v118 = vsel %vm117, %v112, 0.0
  %vm119 = vcmask 7168
  %v120 = vsel %vm119, %v118, 0.0
  %121 = vadd.xlane.f32.xlu0 %v120
  %v122 = vpop.xlane.xlu0 %121
  %v123 = vrot.slane %v122, 4
  %v124 = vadd.f32 %v122, %v123
  %v125 = vrot.slane %v124, 2
  %v126 = vadd.f32 %v124, %v125
  %v127 = vrot.slane %v126, 1
  %v128 = vadd.f32 %v126, %v127
  %s129 = vtos %v128
  %vm130 = vcmp.eq.s32.totalorder %v114, 0
  %vm131 = vcmp.eq.s32.totalorder %v18, 0
  %vm132 = vmand %vm130, %vm131
  %v133 = vstv %s129
  %v134 = vsel %vm132, %v133, 0.0
  %135 = vst [vmem:[%s3] sm:$0xff] %v134
  // Predicated region
  $region14: #{center_loss.1} parent=0 // pred_check
    _
  $region15: #{center_loss.1} parent=0 // pred_check_branch
    %137 = sbr.rel (0) target = $region17
  $region16: #{center_loss.1} parent=0 // pred_region
    _
  $region17: #{center_loss.1} parent=0 // pred_fallthru
    _
  // Predicated region
  $region18: #{center_loss.1} parent=0 // pred_check
    _
  $region19: #{center_loss.1} parent=0 // pred_check_branch
    %139 = sbr.rel (0) target = $region21
  $region20: #{center_loss.1} parent=0 // pred_region
    _
  $region21: #{center_loss.1} parent=0 // pred_fallthru
    _

</llo_original>
